<compile_context>
chip_gen: v5e
topology: v5e:2x2
jax: 0.10.0
libtpu: 0.0.40
codegen_flags: <defaults>
</compile_context>

<pallas_src>
import functools

import jax
import jax.numpy as jnp
from jax import lax
from jax.experimental import pallas as pl
from jax.experimental.pallas import tpu as pltpu


def _layer_norm_kernel(x_ref, g_ref, b_ref, o_ref, *, eps: float, inv_c: float):
    # x_ref/o_ref: (b_blk, C, t_blk); g_ref/b_ref: (1, C, 1)
    x = x_ref[...].astype(jnp.float32)

    # Centered two-pass moments over the channel (sublane) axis.
    mean = jnp.sum(x, axis=1, keepdims=True) * inv_c      # (b_blk, 1, t_blk)
    xc = x - mean
    var = jnp.sum(xc * xc, axis=1, keepdims=True) * inv_c  # (b_blk, 1, t_blk)
    inv = lax.rsqrt(var + eps)

    gamma = g_ref[...].astype(jnp.float32)                  # (1, C, 1)
    beta = b_ref[...].astype(jnp.float32)                   # (1, C, 1)

    o_ref[...] = (xc * inv * gamma + beta).astype(o_ref.dtype)


def _vmem_limit_bytes() -> int:
    """Per-generation scoped VMEM limit: ~3/4 of physical, capped at 100 MiB."""
    try:
        cap = pltpu.get_tpu_info().vmem_capacity_bytes
    except Exception:
        cap = 64 * 1024 * 1024  # conservative (v7x per-TC physical)
    return min(100 * 1024 * 1024, (cap * 3) // 4)


def _pick_blocks(B: int, C: int, T: int, itemsize: int, vmem_limit: int):
    """Choose (b_blk, t_blk) so x+out double-buffered fit the VMEM budget."""
    # 4 live big buffers (x, out, each double-buffered) + small headroom.
    budget = max(vmem_limit - (2 << 20), 1 << 20) // 4
    col_bytes = C * itemsize

    # Lane-dense T tiling: t_blk must be a multiple of 128 or the full T.
    if T <= 128:
        # TODO(synk): T < 128 emits masked vst.msk stores; a [B*T, C]-style
        # lane-dense repack would be needed to avoid them for tiny T.
        t_blk = T
    else:
        max_t = budget // col_bytes
        if max_t >= T:
            t_blk = T
        else:
            t_blk = min(max(128, (max_t // 128) * 128), T)
            # Prefer a multiple of 128 that divides T (no masked remainder tile).
            for cand in range(t_blk, 127, -128):
                if T % cand == 0:
                    t_blk = cand
                    break

    # Fold batches into the block once the whole T fits.
    b_blk = 1
    if t_blk == T:
        b_blk = max(1, min(B, budget // max(1, col_bytes * T)))

    # Keep >= 2 grid steps so both v7x TensorCores get work.
    def steps(bb, tb):
        return pl.cdiv(B, bb) * pl.cdiv(T, tb)

    if steps(b_blk, t_blk) < 2:
        if B >= 2:
            b_blk = max(1, (B + 1) // 2)          # -> 2 batch steps
        elif T >= 256:
            t_blk = max(128, (((T + 1) // 2) // 128) * 128)

    return b_blk, t_blk


def layer_norm_pallas(x, gamma, beta, *, eps: float = 1e-5, block_override=None):
    """x: [B, C, T] (channel-first, like the PyTorch module). Returns [B, C, T]."""
    B, C, T = x.shape
    itemsize = jnp.dtype(x.dtype).itemsize
    vmem_limit = _vmem_limit_bytes()

    if block_override is not None:
        b_blk, t_blk = block_override
        assert t_blk == T or t_blk % 128 == 0, "t_blk must be full T or a multiple of 128"
    else:
        b_blk, t_blk = _pick_blocks(B, C, T, itemsize, vmem_limit)

    g3d = gamma.reshape(1, C, 1)
    b3d = beta.reshape(1, C, 1)

    kernel = functools.partial(_layer_norm_kernel, eps=eps, inv_c=1.0 / C)

    grid = (pl.cdiv(B, b_blk), pl.cdiv(T, t_blk))

    out = pl.pallas_call(
        kernel,
        out_shape=jax.ShapeDtypeStruct((B, C, T), x.dtype),
        grid_spec=pltpu.PrefetchScalarGridSpec(
            num_scalar_prefetch=0,
            grid=grid,
            in_specs=[
                pl.BlockSpec((b_blk, C, t_blk), lambda b, t: (b, 0, t)),
                pl.BlockSpec((1, C, 1), lambda b, t: (0, 0, 0)),
                pl.BlockSpec((1, C, 1), lambda b, t: (0, 0, 0)),
            ],
            out_specs=pl.BlockSpec((b_blk, C, t_blk), lambda b, t: (b, 0, t)),
        ),
        compiler_params=pltpu.CompilerParams(
            dimension_semantics=("parallel", "parallel"),
            vmem_limit_bytes=vmem_limit,
        ),
    )(x, g3d, b3d)

    return out


def layer_norm_ref(x, gamma, beta, eps=1e-5):
    # pure-JAX reference mirroring the PyTorch forward
    xt = jnp.transpose(x, (0, 2, 1)).astype(jnp.float32)
    mean = jnp.mean(xt, axis=-1, keepdims=True)
    var = jnp.mean((xt - mean) ** 2, axis=-1, keepdims=True)
    y = (xt - mean) / jnp.sqrt(var + eps) * gamma + beta
    return jnp.transpose(y, (0, 2, 1)).astype(x.dtype)


if __name__ == "__main__":
    key = jax.random.PRNGKey(0)
    B, C, T = 2, 32, 512  # batch, channels, time (NCT like the PyTorch module)

    x = jax.random.normal(key, (B, C, T), dtype=jnp.float32)
    # Deterministic parameter init matching nn.Parameter(torch.ones/zeros(channels))
    gamma = jnp.ones((C,), dtype=jnp.float32)
    beta = jnp.zeros((C,), dtype=jnp.float32)

    # Auto-sized blocks (whole T per step, batch split across the 2 TCs).
    out = jax.block_until_ready(layer_norm_pallas(x, gamma, beta, eps=1e-5))
    ref = layer_norm_ref(x, gamma, beta, eps=1e-5)
    assert out.shape == (B, C, T)
    assert jnp.allclose(out, ref, atol=1e-5, rtol=1e-5)

    # Remainder T-tile path (pl.cdiv padding) with a forced small block.
    x2 = jax.random.normal(jax.random.PRNGKey(1), (B, C, 384), dtype=jnp.float32)
    out2 = jax.block_until_ready(layer_norm_pallas(x2, gamma, beta, block_override=(1, 256)))
    assert jnp.allclose(out2, layer_norm_ref(x2, gamma, beta), atol=1e-5, rtol=1e-5)

    # Batch-blocked path (b_blk > 1).
    x3 = jax.random.normal(jax.random.PRNGKey(2), (4, C, 256), dtype=jnp.float32)
    out3 = jax.block_until_ready(layer_norm_pallas(x3, gamma, beta, block_override=(2, 256)))
    assert jnp.allclose(out3, layer_norm_ref(x3, gamma, beta), atol=1e-5, rtol=1e-5)

    # bf16 at the boundary (fp32 stats inside), looser tolerance.
    xb = x.astype(jnp.bfloat16)
    outb = jax.block_until_ready(layer_norm_pallas(xb, gamma, beta))
    refb = layer_norm_ref(xb, gamma, beta)
    assert jnp.allclose(outb.astype(jnp.float32), refb.astype(jnp.float32), atol=3e-2, rtol=3e-2)

    print("KERNEL_OK")
</pallas_src>

<mosaic_0001>
module attributes {stable_mosaic.version = 11 : i64} {
  func.func @_layer_norm_kernel(%arg0: i32, %arg1: i32, %arg2: memref<1x32x512xf32, #tpu.memory_space<vmem>>, %arg3: memref<1x32x1xf32, #tpu.memory_space<vmem>>, %arg4: memref<1x32x1xf32, #tpu.memory_space<vmem>>, %arg5: memref<1x32x512xf32, #tpu.memory_space<vmem>>) attributes {dimension_semantics = [#tpu.dimension_semantics<parallel>, #tpu.dimension_semantics<parallel>], iteration_bounds = array<i64: 2, 1>, scalar_prefetch = 0 : i64, scratch_operands = 0 : i64, tpu.core_type = #tpu.core_type<tc>, window_params = [{transform_indices = @transform_0, window_bounds = array<i64: 1, 32, 512>}, {pipeline_mode = #tpu.pipeline_mode<synchronous>, transform_indices = @transform_1, window_bounds = array<i64: 1, 32, 1>}, {pipeline_mode = #tpu.pipeline_mode<synchronous>, transform_indices = @transform_2, window_bounds = array<i64: 1, 32, 1>}, {transform_indices = @transform_3, window_bounds = array<i64: 1, 32, 512>}]} {
    %c0 = arith.constant 0 : index
    %c0_0 = arith.constant 0 : index
    %c0_1 = arith.constant 0 : index
    %0 = vector.load %arg2[%c0, %c0_0, %c0_1] : memref<1x32x512xf32, #tpu.memory_space<vmem>>, vector<1x32x512xf32>
    %cst = arith.constant dense<0.000000e+00> : vector<1x512xf32>
    %1 = vector.multi_reduction <add>, %0, %cst [1] : vector<1x32x512xf32> to vector<1x512xf32>
    %2 = vector.shape_cast %1 : vector<1x512xf32> to vector<1x1x512xf32>
    %cst_2 = arith.constant 3.125000e-02 : f32
    %3 = vector.broadcast %cst_2 : f32 to vector<1x1x512xf32>
    %4 = arith.mulf %2, %3 : vector<1x1x512xf32>
    %5 = vector.broadcast %4 : vector<1x1x512xf32> to vector<1x32x512xf32>
    %6 = arith.subf %0, %5 : vector<1x32x512xf32>
    %7 = arith.mulf %6, %6 : vector<1x32x512xf32>
    %cst_3 = arith.constant dense<0.000000e+00> : vector<1x512xf32>
    %8 = vector.multi_reduction <add>, %7, %cst_3 [1] : vector<1x32x512xf32> to vector<1x512xf32>
    %9 = vector.shape_cast %8 : vector<1x512xf32> to vector<1x1x512xf32>
    %cst_4 = arith.constant 3.125000e-02 : f32
    %10 = vector.broadcast %cst_4 : f32 to vector<1x1x512xf32>
    %11 = arith.mulf %9, %10 : vector<1x1x512xf32>
    %cst_5 = arith.constant 9.99999974E-6 : f32
    %12 = vector.broadcast %cst_5 : f32 to vector<1x1x512xf32>
    %13 = arith.addf %11, %12 : vector<1x1x512xf32>
    %14 = math.rsqrt %13 : vector<1x1x512xf32>
    %c0_6 = arith.constant 0 : index
    %c0_7 = arith.constant 0 : index
    %c0_8 = arith.constant 0 : index
    %15 = vector.load %arg3[%c0_6, %c0_7, %c0_8] : memref<1x32x1xf32, #tpu.memory_space<vmem>>, vector<1x32x1xf32>
    %c0_9 = arith.constant 0 : index
    %c0_10 = arith.constant 0 : index
    %c0_11 = arith.constant 0 : index
    %16 = vector.load %arg4[%c0_9, %c0_10, %c0_11] : memref<1x32x1xf32, #tpu.memory_space<vmem>>, vector<1x32x1xf32>
    %17 = vector.broadcast %14 : vector<1x1x512xf32> to vector<1x32x512xf32>
    %18 = arith.mulf %6, %17 : vector<1x32x512xf32>
    %19 = vector.broadcast %15 : vector<1x32x1xf32> to vector<1x32x512xf32>
    %20 = arith.mulf %18, %19 : vector<1x32x512xf32>
    %21 = vector.broadcast %16 : vector<1x32x1xf32> to vector<1x32x512xf32>
    %22 = arith.addf %20, %21 : vector<1x32x512xf32>
    %c0_12 = arith.constant 0 : index
    %c0_13 = arith.constant 0 : index
    %c0_14 = arith.constant 0 : index
    %23 = vector.load %arg5[%c0_12, %c0_13, %c0_14] : memref<1x32x512xf32, #tpu.memory_space<vmem>>, vector<1x32x512xf32>
    tpu.vector_store %arg5[%c0_12, %c0_13, %c0_14], %22 {strides = array<i32>} : memref<1x32x512xf32, #tpu.memory_space<vmem>>, vector<1x32x512xf32>,
    return
  }
  func.func @transform_0(%arg0: i32, %arg1: i32) -> (i32, i32, i32) {
    %c0_i32 = arith.constant 0 : i32
    %c0_i32_0 = arith.constant 0 : i32
    return %arg0, %c0_i32, %arg1 : i32, i32, i32
  }
  func.func @transform_1(%arg0: i32, %arg1: i32) -> (i32, i32, i32) {
    %c0_i32 = arith.constant 0 : i32
    %c0_i32_0 = arith.constant 0 : i32
    %c0_i32_1 = arith.constant 0 : i32
    %c0_i32_2 = arith.constant 0 : i32
    return %c0_i32, %c0_i32_0, %c0_i32_1 : i32, i32, i32
  }
  func.func @transform_2(%arg0: i32, %arg1: i32) -> (i32, i32, i32) {
    %c0_i32 = arith.constant 0 : i32
    %c0_i32_0 = arith.constant 0 : i32
    %c0_i32_1 = arith.constant 0 : i32
    %c0_i32_2 = arith.constant 0 : i32
    return %c0_i32, %c0_i32_0, %c0_i32_1 : i32, i32, i32
  }
  func.func @transform_3(%arg0: i32, %arg1: i32) -> (i32, i32, i32) {
    %c0_i32 = arith.constant 0 : i32
    %c0_i32_0 = arith.constant 0 : i32
    return %arg0, %c0_i32, %arg1 : i32, i32, i32
  }
}

</mosaic_0001>

<llo_original>
// kernel: tpu_custom_call.1
$region0: #{tpu_custom_call.1}
  #allocation0 [shape = 'u32[]', space=smem, size = 0x4, offset = 0x4, fixed_abs, tag = 'smem constant byte address 0x4 - core index']
  #allocation1 [shape = 'u32[72,128]{1,0:T(1,128)}', space=vmem, size = 0x9000, scoped, tag = 'internal scratch']
  %s0 = inlined_call_operand.hbm [shape: f32[2,32,512], index: 0, kind: input, shape index: {}]
  %s1 = inlined_call_operand.vmem [shape: f32[1,32,1], index: 1, kind: input, shape index: {}]
  %s2 = inlined_call_operand.vmem [shape: f32[1,32,1], index: 2, kind: input, shape index: {}]
  %s3 = inlined_call_operand.hbm [shape: f32[2,32,512], index: 3, kind: output, shape index: {}]
  %s4 = sld [smem:[#allocation0]]
  $region49: #{tpu_custom_call.1} parent=0
    _
  %s6 = ssub.s32 1, %s4
  %s7 = scalar_select 0, %s6, %s4
  $region1: #{tpu_custom_call.1} parent=0
    #allocation2 [shape = 'u8[131072]{0}', space=vmem, size = 0x20000, scoped, tag = 'input window, operand 0']
    #allocation3 [shape = 's32[2]{0}', space=sflag, size = 0x8, scoped, tag = 'scoped memory for tpu_custom_call.1']
    #allocation4 [shape = 's32[2]{0}', space=sflag, size = 0x8, scoped, tag = 'scoped memory for tpu_custom_call.1']
    #allocation5 [shape = 'u8[131072]{0}', space=vmem, size = 0x20000, scoped, tag = 'output window, operand 0']
    %8 = vsyncpa [#allocation3], 0
    %s9 = scalar_lea.sflag [#allocation3], 1
    %10 = vsyncpa %s9, 0
    %11 = vsyncpa [#allocation4], 0
    %s12 = scalar_lea.sflag [#allocation4], 1
    %13 = vsyncpa %s12, 0
    loop: start=0, step=1, limit=4
    $region2: #{tpu_custom_call.1} parent=1 // loop_pre_header
      _
    $region3: #{tpu_custom_call.1} parent=1 // loop_header
      %s15 = sphi 0, %s19
      %p16 = scmp.ge.s32.totalorder %s15, 4
      %s22 = sphi 0, %s34
      %s23 = sphi 0, %s30
      %s24 = sphi 0, %s22
      %s25 = sphi 0, %s23
      %s26 = sphi 0, %s24
      %s27 = sphi 0, %s25
      %s39 = sphi 0, %s41
      %s42 = sphi 0, %s39
      %s43 = sphi 0, %s42
      %s59 = sphi 0, %s43
      %s63 = sphi 0, %s63
      %s65 = sphi 0, %s63
      %s66 = sphi 0, %s65
      %s80 = sphi 0, %s66
      %s84 = sphi 0, %s84
      %s86 = sphi 0, %s84
      %s87 = sphi 0, %s86
      %s101 = sphi 0, %s87
      %s109 = sphi 0, %s111
      %s112 = sphi 0, %s109
      %s113 = sphi 0, %s112
      %s129 = sphi 0, %s113
    $region4: #{tpu_custom_call.1} parent=1 // loop_header_branch
      %18 = sbr.rel (%p16) target = $region8
    $region5: #{tpu_custom_call.1} parent=1 // loop_body
      %s20 = ssub.s32 %s15, 1
      %s21 = ssub.s32 %s15, 2
      %s28 = sadd.s32 1, %s23
      %p29 = scmp.ge.s32.totalorder %s28, 1
      %s30 = scalar_select %p29, 0, %s28
      %s31 = sadd.s32 1, %s22
      %s32 = scalar_select %p29, %s31, %s22
      %p33 = scmp.ge.s32.totalorder %s32, 2
      %s34 = scalar_select %p33, 0, %s32
      %s35 = ssub.s32 %s22, %s34
      %s36 = ssub.s32 %s23, %s30
      %s37 = sor.u32 %s35, %s36
      %p38 = scmp.eq.s32.totalorder %s37, 0
      %s40 = sadd.s32 %s39, 1
      %s41 = scalar_select %p38, %s39, %s40
      %p44 = pneg %p38
      %p45 = scmp.eq.s32.totalorder %s15, 1
      %p46 = por %p44, %p45
      %p47 = scmp.ne.s32.totalorder %s39, %s42
      %p48 = scmp.eq.s32.totalorder %s15, 0
      %p49 = por %p47, %p48
      %p50 = scmp.ne.s32.totalorder %s39, %s42
      %p51 = scmp.eq.s32.totalorder %s20, 1
      %p52 = por %p50, %p51
      %p53 = scmp.ne.s32.totalorder %s42, %s43
      %p54 = scmp.eq.s32.totalorder %s20, 0
      %p55 = por %p53, %p54
      %p56 = scmp.ne.s32.totalorder %s42, %s43
      %p57 = scmp.eq.s32.totalorder %s21, 1
      %p58 = por %p56, %p57
      %p60 = scmp.ne.s32.totalorder %s43, %s59
      %p61 = scmp.eq.s32.totalorder %s21, 0
      %p62 = por %p60, %p61
      %s64 = sadd.s32 %s63, 1
      %p67 = scmp.eq.s32.totalorder %s15, 1
      %p68 = scmp.ne.s32.totalorder %s63, %s65
      %p69 = scmp.eq.s32.totalorder %s15, 0
      %p70 = por %p68, %p69
      %p71 = scmp.ne.s32.totalorder %s63, %s65
      %p72 = scmp.eq.s32.totalorder %s20, 1
      %p73 = por %p71, %p72
      %p74 = scmp.ne.s32.totalorder %s65, %s66
      %p75 = scmp.eq.s32.totalorder %s20, 0
      %p76 = por %p74, %p75
      %p77 = scmp.ne.s32.totalorder %s65, %s66
      %p78 = scmp.eq.s32.totalorder %s21, 1
      %p79 = por %p77, %p78
      %p81 = scmp.ne.s32.totalorder %s66, %s80
      %p82 = scmp.eq.s32.totalorder %s21, 0
      %p83 = por %p81, %p82
      %s85 = sadd.s32 %s84, 1
      %p88 = scmp.eq.s32.totalorder %s15, 1
      %p89 = scmp.ne.s32.totalorder %s84, %s86
      %p90 = scmp.eq.s32.totalorder %s15, 0
      %p91 = por %p89, %p90
      %p92 = scmp.ne.s32.totalorder %s84, %s86
      %p93 = scmp.eq.s32.totalorder %s20, 1
      %p94 = por %p92, %p93
      %p95 = scmp.ne.s32.totalorder %s86, %s87
      %p96 = scmp.eq.s32.totalorder %s20, 0
      %p97 = por %p95, %p96
      %p98 = scmp.ne.s32.totalorder %s86, %s87
      %p99 = scmp.eq.s32.totalorder %s21, 1
      %p100 = por %p98, %p99
      %p102 = scmp.ne.s32.totalorder %s87, %s101
      %p103 = scmp.eq.s32.totalorder %s21, 0
      %p104 = por %p102, %p103
      %s105 = ssub.s32 %s22, %s34
      %s106 = ssub.s32 %s23, %s30
      %s107 = sor.u32 %s105, %s106
      %p108 = scmp.eq.s32.totalorder %s107, 0
      %s110 = sadd.s32 %s109, 1
      %s111 = scalar_select %p108, %s109, %s110
      %p114 = pneg %p108
      %p115 = scmp.eq.s32.totalorder %s15, 1
      %p116 = por %p114, %p115
      %p117 = scmp.ne.s32.totalorder %s109, %s112
      %p118 = scmp.eq.s32.totalorder %s15, 0
      %p119 = por %p117, %p118
      %p120 = scmp.ne.s32.totalorder %s109, %s112
      %p121 = scmp.eq.s32.totalorder %s20, 1
      %p122 = por %p120, %p121
      %p123 = scmp.ne.s32.totalorder %s112, %s113
      %p124 = scmp.eq.s32.totalorder %s20, 0
      %p125 = por %p123, %p124
      %p126 = scmp.ne.s32.totalorder %s112, %s113
      %p127 = scmp.eq.s32.totalorder %s21, 1
      %p128 = por %p126, %p127
      %p130 = scmp.ne.s32.totalorder %s113, %s129
      %p131 = scmp.eq.s32.totalorder %s21, 0
      %p132 = por %p130, %p131
      %p133 = scmp.le.s32.totalorder 1, %s15
      %p134 = scmp.lt.s32.totalorder %s15, 3
      %p135 = pnand %p133, %p134
      %p136 = pneg %p135
      // Predicated region
      $region9: #{tpu_custom_call.1} parent=5 // pred_check
        _
      $region10: #{tpu_custom_call.1} parent=5 // pred_check_branch
        %138 = sbr.rel (%p135) target = $region12
      $region11: #{tpu_custom_call.1} parent=5 // pred_region
        %s139 = ssub.s32 %s15, 1
        // Predicated region
        $region13: #{tpu_custom_call.1} parent=11 // pred_check
          %p140 = pneg %p76
        $region14: #{tpu_custom_call.1} parent=11 // pred_check_branch
          %142 = sbr.rel (%p140) target = $region16
        $region15: #{tpu_custom_call.1} parent=11 // pred_region
          _
        $region16: #{tpu_custom_call.1} parent=11 // pred_fallthru
          _
        // Predicated region
        $region17: #{tpu_custom_call.1} parent=11 // pred_check
          %p143 = pneg %p97
        $region18: #{tpu_custom_call.1} parent=11 // pred_check_branch
          %145 = sbr.rel (%p143) target = $region20
        $region19: #{tpu_custom_call.1} parent=11 // pred_region
          _
        $region20: #{tpu_custom_call.1} parent=11 // pred_fallthru
          _
      $region12: #{tpu_custom_call.1} parent=5 // pred_fallthru
        _
      %p146 = scmp.lt.s32.totalorder %s15, 2
      // Predicated region
      $region21: #{tpu_custom_call.1} parent=5 // pred_check
        %p147 = pneg %p146
      $region22: #{tpu_custom_call.1} parent=5 // pred_check_branch
        %149 = sbr.rel (%p147) target = $region24
      $region23: #{tpu_custom_call.1} parent=5 // pred_region
        // Predicated region
        $region25: #{tpu_custom_call.1} parent=23 // pred_check
          %p150 = pneg %p49
        $region26: #{tpu_custom_call.1} parent=23 // pred_check_branch
          %152 = sbr.rel (%p150) target = $region28
        $region27: #{tpu_custom_call.1} parent=23 // pred_region
          %s153 = sand.u32 %s39, 1
          %s154 = scalar_lea.sflag [#allocation3], %s153
          %s155 = sand.u32 %s39, 1
          %s156 = smul.addr %s155, 128
          %s157 = scalar_lea.vmem [#allocation2], %s156
          %s158 = smul.u32 4, %s23
          %160 = vsyncadd %s154, 0
          %s161 = smul.addr %s22, 16
          %s162 = sadd.s32 %s158, %s161
          %s163 = smul.addr %s162, 8
          %s164 = scalar_lea.hbm %s0, %s163
          %s165 = sshll.u32 %s164, 4
          %s166 = int_to_ptr.hbm [resolvable:$true] %s165
          %s167 = sshll.u32 %s157, 4
          %s168 = int_to_ptr.vmem [resolvable:$true] %s167
          %173 = dma.hbm_to_vmem [thread:$0]  %s166, 2048, %s168, %s154, 512, 512, 32
        $region28: #{tpu_custom_call.1} parent=23 // pred_fallthru
          _
      $region24: #{tpu_custom_call.1} parent=5 // pred_fallthru
        _
      %p174 = scmp.le.s32.totalorder 1, %s15
      %p175 = scmp.lt.s32.totalorder %s15, 3
      %p176 = pnand %p174, %p175
      %p177 = pneg %p176
      // Predicated region
      $region29: #{tpu_custom_call.1} parent=5 // pred_check
        _
      $region30: #{tpu_custom_call.1} parent=5 // pred_check_branch
        %179 = sbr.rel (%p176) target = $region32
      $region31: #{tpu_custom_call.1} parent=5 // pred_region
        %s180 = ssub.s32 %s15, 1
        %s181 = sand.u32 %s42, 1
        %s182 = scalar_lea.sflag [#allocation3], %s181
        %s183 = sand.u32 %s42, 1
        %s184 = smul.addr %s183, 128
        %s185 = scalar_lea.vmem [#allocation2], %s184
        // Predicated region
        $region33: #{tpu_custom_call.1} parent=31 // pred_check
          %p186 = pneg %p55
        $region34: #{tpu_custom_call.1} parent=31 // pred_check_branch
          %188 = sbr.rel (%p186) target = $region36
        $region35: #{tpu_custom_call.1} parent=31 // pred_region
          %190 = dma.done %s182, 2048
        $region36: #{tpu_custom_call.1} parent=31 // pred_fallthru
          _
        %s191 = sand.u32 %s42, 1
        %s192 = scalar_lea.sflag [#allocation3], %s191
        %s193 = sand.u32 %s42, 1
        %s194 = smul.addr %s193, 128
        %s195 = scalar_lea.vmem [#allocation2], %s194
        %p196 = pneg %p55
        %p197 = pneg %p52
        %p198 = pneg %p76
        %p199 = pneg %p73
        %p200 = pneg %p97
        %p201 = pneg %p94
        %p202 = pneg %p125
        %p203 = pneg %p122
        %s204 = sand.u32 %s112, 1
        %s205 = scalar_lea.sflag [#allocation4], %s204
        %s206 = sand.u32 %s112, 1
        %s207 = smul.addr %s206, 128
        %s208 = scalar_lea.vmem [#allocation5], %s207
        %s209 = smul.u32 4, %s25
        %s210 = smul.u32 4, %s25
        %v211 = vld [vmem:[%s185] sm:$0xff]
        %v212 = vld [vmem:[%s185 + $0x8] sm:$0xff]
        %v213 = vld [vmem:[%s185 + $0x10] sm:$0xff]
        %v214 = vld [vmem:[%s185 + $0x18] sm:$0xff]
        %v215 = vld [vmem:[%s185 + $0x20] sm:$0xff]
        %v216 = vld [vmem:[%s185 + $0x28] sm:$0xff]
        %v217 = vld [vmem:[%s185 + $0x30] sm:$0xff]
        %v218 = vld [vmem:[%s185 + $0x38] sm:$0xff]
        %v219 = vld [vmem:[%s185 + $0x40] sm:$0xff]
        %v220 = vld [vmem:[%s185 + $0x48] sm:$0xff]
        %v221 = vld [vmem:[%s185 + $0x50] sm:$0xff]
        %v222 = vld [vmem:[%s185 + $0x58] sm:$0xff]
        %v223 = vld [vmem:[%s185 + $0x60] sm:$0xff]
        %v224 = vld [vmem:[%s185 + $0x68] sm:$0xff]
        %v225 = vld [vmem:[%s185 + $0x70] sm:$0xff]
        %v226 = vld [vmem:[%s185 + $0x78] sm:$0xff]
        %v227 = vadd.f32 %v211, %v215
        %v228 = vadd.f32 %v227, %v219
        %v229 = vadd.f32 %v228, %v223
        %v230 = vrot.slane %v229, 4
        %v231 = vadd.f32 %v229, %v230
        %v232 = vrot.slane %v231, 2
        %v233 = vadd.f32 %v231, %v232
        %v234 = vrot.slane %v233, 1
        %v235 = vadd.f32 %v233, %v234
        %v236 = vadd.f32 %v212, %v216
        %v237 = vadd.f32 %v236, %v220
        %v238 = vadd.f32 %v237, %v224
        %v239 = vrot.slane %v238, 4
        %v240 = vadd.f32 %v238, %v239
        %v241 = vrot.slane %v240, 2
        %v242 = vadd.f32 %v240, %v241
        %v243 = vrot.slane %v242, 1
        %v244 = vadd.f32 %v242, %v243
        %v245 = vadd.f32 %v213, %v217
        %v246 = vadd.f32 %v245, %v221
        %v247 = vadd.f32 %v246, %v225
        %v248 = vrot.slane %v247, 4
        %v249 = vadd.f32 %v247, %v248
        %v250 = vrot.slane %v249, 2
        %v251 = vadd.f32 %v249, %v250
        %v252 = vrot.slane %v251, 1
        %v253 = vadd.f32 %v251, %v252
        %v254 = vadd.f32 %v214, %v218
        %v255 = vadd.f32 %v254, %v222
        %v256 = vadd.f32 %v255, %v226
        %v257 = vrot.slane %v256, 4
        %v258 = vadd.f32 %v256, %v257
        %v259 = vrot.slane %v258, 2
        %v260 = vadd.f32 %v258, %v259
        %v261 = vrot.slane %v260, 1
        %v262 = vadd.f32 %v260, %v261
        %v263 = vmul.f32 %v235, 0.03125
        %v264 = vmul.f32 %v244, 0.03125
        %v265 = vmul.f32 %v253, 0.03125
        %v266 = vmul.f32 %v262, 0.03125
        %v267 = vsub.f32 %v211, %v263
        %v268 = vsub.f32 %v212, %v264
        %v269 = vsub.f32 %v213, %v265
        %v270 = vsub.f32 %v214, %v266
        %v271 = vsub.f32 %v215, %v263
        %v272 = vsub.f32 %v216, %v264
        %v273 = vsub.f32 %v217, %v265
        %v274 = vsub.f32 %v218, %v266
        %v275 = vsub.f32 %v219, %v263
        %v276 = vsub.f32 %v220, %v264
        %v277 = vsub.f32 %v221, %v265
        %v278 = vsub.f32 %v222, %v266
        %v279 = vsub.f32 %v223, %v263
        %v280 = vsub.f32 %v224, %v264
        %v281 = vsub.f32 %v225, %v265
        %v282 = vsub.f32 %v226, %v266
        %v283 = vmul.f32 %v267, %v267
        %v284 = vmul.f32 %v268, %v268
        %v285 = vmul.f32 %v269, %v269
        %v286 = vmul.f32 %v270, %v270
        %v287 = vmul.f32 %v271, %v271
        %v288 = vmul.f32 %v272, %v272
        %v289 = vmul.f32 %v273, %v273
        %v290 = vmul.f32 %v274, %v274
        %v291 = vmul.f32 %v275, %v275
        %v292 = vmul.f32 %v276, %v276
        %v293 = vmul.f32 %v277, %v277
        %v294 = vmul.f32 %v278, %v278
        %v295 = vmul.f32 %v279, %v279
        %v296 = vmul.f32 %v280, %v280
        %v297 = vmul.f32 %v281, %v281
        %v298 = vmul.f32 %v282, %v282
        %v299 = vadd.f32 %v283, %v287
        %v300 = vadd.f32 %v299, %v291
        %v301 = vadd.f32 %v300, %v295
        %v302 = vrot.slane %v301, 4
        %v303 = vadd.f32 %v301, %v302
        %v304 = vrot.slane %v303, 2
        %v305 = vadd.f32 %v303, %v304
        %v306 = vrot.slane %v305, 1
        %v307 = vadd.f32 %v305, %v306
        %v308 = vadd.f32 %v284, %v288
        %v309 = vadd.f32 %v308, %v292
        %v310 = vadd.f32 %v309, %v296
        %v311 = vrot.slane %v310, 4
        %v312 = vadd.f32 %v310, %v311
        %v313 = vrot.slane %v312, 2
        %v314 = vadd.f32 %v312, %v313
        %v315 = vrot.slane %v314, 1
        %v316 = vadd.f32 %v314, %v315
        %v317 = vadd.f32 %v285, %v289
        %v318 = vadd.f32 %v317, %v293
        %v319 = vadd.f32 %v318, %v297
        %v320 = vrot.slane %v319, 4
        %v321 = vadd.f32 %v319, %v320
        %v322 = vrot.slane %v321, 2
        %v323 = vadd.f32 %v321, %v322
        %v324 = vrot.slane %v323, 1
        %v325 = vadd.f32 %v323, %v324
        %v326 = vadd.f32 %v286, %v290
        %v327 = vadd.f32 %v326, %v294
        %v328 = vadd.f32 %v327, %v298
        %v329 = vrot.slane %v328, 4
        %v330 = vadd.f32 %v328, %v329
        %v331 = vrot.slane %v330, 2
        %v332 = vadd.f32 %v330, %v331
        %v333 = vrot.slane %v332, 1
        %v334 = vadd.f32 %v332, %v333
        %v335 = vmul.f32 %v307, 0.03125
        %v336 = vmul.f32 %v316, 0.03125
        %v337 = vmul.f32 %v325, 0.03125
        %v338 = vmul.f32 %v334, 0.03125
        %v339 = vadd.f32 %v335, 1e-05
        %v340 = vadd.f32 %v336, 1e-05
        %v341 = vadd.f32 %v337, 1e-05
        %v342 = vadd.f32 %v338, 1e-05
        %v343 = vrsqrt.pop %v339
        %v344 = vmul.f32 %v343, %v339
        %v345 = vmul.f32 %v344, %v343
        %v346 = vmul.f32 0.5, %v345
        %v347 = vsub.f32 1.5, %v346
        %v348 = vmul.f32 %v343, %v347
        %vm349 = vweird.f32 %v339
        %vm350 = vweird.f32 %v343
        %vm351 = vmor %vm349, %vm350
        %v352 = vsel %vm351, %v343, %v348
        %v353 = vrsqrt.pop %v340
        %v354 = vmul.f32 %v353, %v340
        %v355 = vmul.f32 %v354, %v353
        %v356 = vmul.f32 0.5, %v355
        %v357 = vsub.f32 1.5, %v356
        %v358 = vmul.f32 %v353, %v357
        %vm359 = vweird.f32 %v340
        %vm360 = vweird.f32 %v353
        %vm361 = vmor %vm359, %vm360
        %v362 = vsel %vm361, %v353, %v358
        %v363 = vrsqrt.pop %v341
        %v364 = vmul.f32 %v363, %v341
        %v365 = vmul.f32 %v364, %v363
        %v366 = vmul.f32 0.5, %v365
        %v367 = vsub.f32 1.5, %v366
        %v368 = vmul.f32 %v363, %v367
        %vm369 = vweird.f32 %v341
        %vm370 = vweird.f32 %v363
        %vm371 = vmor %vm369, %vm370
        %v372 = vsel %vm371, %v363, %v368
        %v373 = vrsqrt.pop %v342
        %v374 = vmul.f32 %v373, %v342
        %v375 = vmul.f32 %v374, %v373
        %v376 = vmul.f32 0.5, %v375
        %v377 = vsub.f32 1.5, %v376
        %v378 = vmul.f32 %v373, %v377
        %vm379 = vweird.f32 %v342
        %vm380 = vweird.f32 %v373
        %vm381 = vmor %vm379, %vm380
        %v382 = vsel %vm381, %v373, %v378
        %v383 = vld [vmem:[%s1] sm:$0xff]
        %v384 = vld [vmem:[%s1 + $0x8] sm:$0xff]
        %v385 = vld [vmem:[%s1 + $0x10] sm:$0xff]
        %v386 = vld [vmem:[%s1 + $0x18] sm:$0xff]
        %v387 = vld [vmem:[%s2] sm:$0xff]
        %v388 = vld [vmem:[%s2 + $0x8] sm:$0xff]
        %v389 = vld [vmem:[%s2 + $0x10] sm:$0xff]
        %v390 = vld [vmem:[%s2 + $0x18] sm:$0xff]
        %v391 = vmul.f32 %v267, %v352
        %v392 = vmul.f32 %v268, %v362
        %v393 = vmul.f32 %v269, %v372
        %v394 = vmul.f32 %v270, %v382
        %v395 = vmul.f32 %v271, %v352
        %v396 = vmul.f32 %v272, %v362
        %v397 = vmul.f32 %v273, %v372
        %v398 = vmul.f32 %v274, %v382
        %v399 = vmul.f32 %v275, %v352
        %v400 = vmul.f32 %v276, %v362
        %v401 = vmul.f32 %v277, %v372
        %v402 = vmul.f32 %v278, %v382
        %v403 = vmul.f32 %v279, %v352
        %v404 = vmul.f32 %v280, %v362
        %v405 = vmul.f32 %v281, %v372
        %v406 = vmul.f32 %v282, %v382
        %408 = vset.pattern.permute.xlu0 0
        %409 = vperm.xlu0 %408, %v383
        %v410 = vpop.permute.xlu0 %409
        %413 = vset.pattern.permute.xlu0 0
        %414 = vperm.xlu0 %413, %v384
        %v415 = vpop.permute.xlu0 %414
        %418 = vset.pattern.permute.xlu0 0
        %419 = vperm.xlu0 %418, %v385
        %v420 = vpop.permute.xlu0 %419
        %423 = vset.pattern.permute.xlu0 0
        %424 = vperm.xlu0 %423, %v386
        %v425 = vpop.permute.xlu0 %424
        %v427 = vmul.f32 %v391, %v410
        %v428 = vmul.f32 %v392, %v410
        %v429 = vmul.f32 %v393, %v410
        %v430 = vmul.f32 %v394, %v410
        %v431 = vmul.f32 %v395, %v415
        %v432 = vmul.f32 %v396, %v415
        %v433 = vmul.f32 %v397, %v415
        %v434 = vmul.f32 %v398, %v415
        %v435 = vmul.f32 %v399, %v420
        %v436 = vmul.f32 %v400, %v420
        %v437 = vmul.f32 %v401, %v420
        %v438 = vmul.f32 %v402, %v420
        %v439 = vmul.f32 %v403, %v425
        %v440 = vmul.f32 %v404, %v425
        %v441 = vmul.f32 %v405, %v425
        %v442 = vmul.f32 %v406, %v425
        %444 = vset.pattern.permute.xlu0 0
        %445 = vperm.xlu0 %444, %v387
        %v446 = vpop.permute.xlu0 %445
        %449 = vset.pattern.permute.xlu0 0
        %450 = vperm.xlu0 %449, %v388
        %v451 = vpop.permute.xlu0 %450
        %454 = vset.pattern.permute.xlu0 0
        %455 = vperm.xlu0 %454, %v389
        %v456 = vpop.permute.xlu0 %455
        %459 = vset.pattern.permute.xlu0 0
        %460 = vperm.xlu0 %459, %v390
        %v461 = vpop.permute.xlu0 %460
        %v463 = vadd.f32 %v427, %v446
        %v464 = vadd.f32 %v428, %v446
        %v465 = vadd.f32 %v429, %v446
        %v466 = vadd.f32 %v430, %v446
        %v467 = vadd.f32 %v431, %v451
        %v468 = vadd.f32 %v432, %v451
        %v469 = vadd.f32 %v433, %v451
        %v470 = vadd.f32 %v434, %v451
        %v471 = vadd.f32 %v435, %v456
        %v472 = vadd.f32 %v436, %v456
        %v473 = vadd.f32 %v437, %v456
        %v474 = vadd.f32 %v438, %v456
        %v475 = vadd.f32 %v439, %v461
        %v476 = vadd.f32 %v440, %v461
        %v477 = vadd.f32 %v441, %v461
        %v478 = vadd.f32 %v442, %v461
        %479 = vst [vmem:[%s208] sm:$0xff] %v463
        %480 = vst [vmem:[%s208 + $0x8] sm:$0xff] %v464
        %481 = vst [vmem:[%s208 + $0x10] sm:$0xff] %v465
        %482 = vst [vmem:[%s208 + $0x18] sm:$0xff] %v466
        %483 = vst [vmem:[%s208 + $0x20] sm:$0xff] %v467
        %484 = vst [vmem:[%s208 + $0x28] sm:$0xff] %v468
        %485 = vst [vmem:[%s208 + $0x30] sm:$0xff] %v469
        %486 = vst [vmem:[%s208 + $0x38] sm:$0xff] %v470
        %487 = vst [vmem:[%s208 + $0x40] sm:$0xff] %v471
        %488 = vst [vmem:[%s208 + $0x48] sm:$0xff] %v472
        %489 = vst [vmem:[%s208 + $0x50] sm:$0xff] %v473
        %490 = vst [vmem:[%s208 + $0x58] sm:$0xff] %v474
        %491 = vst [vmem:[%s208 + $0x60] sm:$0xff] %v475
        %492 = vst [vmem:[%s208 + $0x68] sm:$0xff] %v476
        %493 = vst [vmem:[%s208 + $0x70] sm:$0xff] %v477
        %494 = vst [vmem:[%s208 + $0x78] sm:$0xff] %v478
        %s495 = sand.u32 %s112, 1
        %s496 = scalar_lea.sflag [#allocation4], %s495
        %s497 = sand.u32 %s112, 1
        %s498 = smul.addr %s497, 128
        %s499 = scalar_lea.vmem [#allocation5], %s498
        // Predicated region
        $region37: #{tpu_custom_call.1} parent=31 // pred_check
          %p500 = pneg %p122
        $region38: #{tpu_custom_call.1} parent=31 // pred_check_branch
          %502 = sbr.rel (%p500) target = $region40
        $region39: #{tpu_custom_call.1} parent=31 // pred_region
          %s503 = smul.u32 4, %s25
          %505 = vsyncadd %s496, 0
          %s506 = smul.addr %s24, 16
          %s507 = sadd.s32 %s503, %s506
          %s508 = smul.addr %s507, 8
          %s509 = scalar_lea.hbm %s3, %s508
          %s510 = sshll.u32 %s499, 4
          %s511 = int_to_ptr.vmem [resolvable:$true] %s510
          %s512 = sshll.u32 %s509, 4
          %s513 = int_to_ptr.hbm [resolvable:$true] %s512
          %518 = dma.vmem_to_hbm [thread:$0]  %s511, 2048, %s513, %s496, 512, 512, 32
        $region40: #{tpu_custom_call.1} parent=31 // pred_fallthru
          _
      $region32: #{tpu_custom_call.1} parent=5 // pred_fallthru
        _
      %p519 = scmp.le.s32.totalorder 2, %s15
      // Predicated region
      $region41: #{tpu_custom_call.1} parent=5 // pred_check
        %p520 = pneg %p519
      $region42: #{tpu_custom_call.1} parent=5 // pred_check_branch
        %522 = sbr.rel (%p520) target = $region44
      $region43: #{tpu_custom_call.1} parent=5 // pred_region
        %s523 = ssub.s32 %s15, 2
        // Predicated region
        $region45: #{tpu_custom_call.1} parent=43 // pred_check
          %p524 = pneg %p128
        $region46: #{tpu_custom_call.1} parent=43 // pred_check_branch
          %526 = sbr.rel (%p524) target = $region48
        $region47: #{tpu_custom_call.1} parent=43 // pred_region
          %s527 = sand.u32 %s113, 1
          %s528 = scalar_lea.sflag [#allocation4], %s527
          %s529 = sand.u32 %s113, 1
          %s530 = smul.addr %s529, 128
          %s531 = scalar_lea.vmem [#allocation5], %s530
          %533 = dma.done %s528, 2048
        $region48: #{tpu_custom_call.1} parent=43 // pred_fallthru
          _
      $region44: #{tpu_custom_call.1} parent=5 // pred_fallthru
        _
    $region6: #{tpu_custom_call.1} parent=1 // loop_footer
      %s19 = sadd.s32 1, %s15
    $region7: #{tpu_custom_call.1} parent=1 // loop_footer_branch
      %14 = sbr.rel target = $region3
    $region8: #{tpu_custom_call.1} parent=1 // loop_exit
      _
    %534 = vsyncpa [#allocation3], 1
    %s535 = scalar_lea.sflag [#allocation3], 1
    %536 = vsyncpa %s535, 1
    %537 = vsyncpa [#allocation4], 1
    %s538 = scalar_lea.sflag [#allocation4], 1
    %539 = vsyncpa %s538, 1

</llo_original>
